<compile_context>
chip_gen: v5e
topology: v5e:2x2
jax: 0.10.0
libtpu: 0.0.40
codegen_flags: <defaults>
</compile_context>

<pallas_src>
import functools

import jax
import jax.numpy as jnp
from jax.experimental import pallas as pl
from jax.experimental.pallas import tpu as pltpu


def _lstm_net_kernel(S, B, H,
                     x_ref, w_ih_ref, w_hh_ref, b_ref, w_out_ref,
                     y_ref):
    # ---- hoisted input projection for ALL timesteps (one MXU matmul) ----
    # (S*B, V) @ (V, 4H) + (1, 4H) -> (S*B, 4H).  i/f/o columns are
    # pre-scaled by 0.5 (see prepare_params) for the tanh-based sigmoid.
    gates_x = (jnp.dot(x_ref[...], w_ih_ref[...],
                       preferred_element_type=jnp.float32)
               + b_ref[...])

    w_hh = w_hh_ref[...]        # (H, 4H) bf16, resident in vregs
    w_out = w_out_ref[...]      # (H, 128) f32, resident in vregs

    h = jnp.zeros((B, H), jnp.float32)
    c = jnp.zeros((B, H), jnp.float32)

    # ---- serial recurrence, fully unrolled (S is small & static) ----
    # Critical path per step: one bf16 MXU matmul + one full-tile tanh +
    # tanh(c) + a few VALU ops.  The output projection and its store are
    # independent of the next step and get overlapped by the scheduler.
    # TODO(synk): on v5e one could additionally pin W_hh in the MXU weight
    # registers via pltpu.matmul_push_rhs / matmul_acc_lhs / matmul_pop;
    # kept portable jnp.dot here.
    for t in range(S):
        gates = gates_x[t * B:(t + 1) * B, :] + jnp.dot(
            h.astype(w_hh.dtype), w_hh,
            preferred_element_type=jnp.float32)            # (B, 4H)

        tg = jnp.tanh(gates)     # ONE full-tile transcendental for all gates
        i_g = tg[:, 0 * H:1 * H]   # tanh(i/2) -> sigmoid(i) = 0.5*(i_g+1)
        f_g = tg[:, 1 * H:2 * H]   # tanh(f/2)
        g_g = tg[:, 2 * H:3 * H]   # tanh(g)   (column block left unscaled)
        o_g = tg[:, 3 * H:4 * H]   # tanh(o/2)

        c = 0.5 * ((f_g + 1.0) * c + (i_g + 1.0) * g_g)
        h = (0.5 * (o_g + 1.0)) * jnp.tanh(c)

        # Per-step output projection, stored straight to the (lane-dense)
        # output ref: no VMEM scratch, no reload before a final matmul.
        y_ref[t * B:(t + 1) * B, :] = jnp.dot(
            h, w_out, preferred_element_type=jnp.float32).astype(y_ref.dtype)


def prepare_params(w_ih, w_hh, b_ih, b_hh, w_out):
    """One-time weight preprocessing (do NOT call per forward step).

    PyTorch convention in: w_ih (4H, V), w_hh (4H, H), b_ih/b_hh (4H,),
    w_out (V, H).  Returns kernel-ready operands:
      w_ih_t  (V, 4H)  f32, i/f/o columns pre-scaled by 0.5
      w_hh_t  (H, 4H)  bf16, i/f/o columns pre-scaled by 0.5
      bias    (1, 4H)  f32, i/f/o entries pre-scaled by 0.5
      w_out_p (H, 128) f32, zero-padded to a lane-dense output width
    """
    H = w_hh.shape[1]
    V = w_out.shape[0]

    # sigmoid(z) = 0.5 * (tanh(z/2) + 1): fold the 1/2 into the i, f, o
    # gate columns so the kernel needs a single tanh over the packed gates.
    scale = jnp.concatenate([
        jnp.full((2 * H,), 0.5, jnp.float32),   # i, f
        jnp.ones((H,), jnp.float32),            # g (real tanh gate)
        jnp.full((H,), 0.5, jnp.float32),       # o
    ])

    w_ih_t = jnp.transpose(w_ih).astype(jnp.float32) * scale[None, :]
    w_hh_t = (jnp.transpose(w_hh).astype(jnp.float32)
              * scale[None, :]).astype(jnp.bfloat16)
    bias = ((b_ih + b_hh).astype(jnp.float32) * scale).reshape(1, 4 * H)

    n_pad = ((V + 127) // 128) * 128            # lane-dense output width
    w_out_p = jnp.zeros((H, n_pad), jnp.float32)
    w_out_p = w_out_p.at[:, :V].set(jnp.transpose(w_out).astype(jnp.float32))
    return w_ih_t, w_hh_t, bias, w_out_p


@jax.jit
def lstm_net_forward(x, w_ih_t, w_hh_t, bias, w_out_p):
    """x: (S, B, V) float. Returns (S*B, V), matching
    `l_out(lstm(x)[0].view(-1, H))` of the PyTorch module."""
    S, B, V = x.shape
    H = w_hh_t.shape[0]
    n_pad = w_out_p.shape[1]

    x_flat = x.reshape(S * B, V).astype(jnp.float32)

    kernel = functools.partial(_lstm_net_kernel, S, B, H)
    vmem = lambda: pl.BlockSpec(memory_space=pltpu.MemorySpace.VMEM)

    y_pad = pl.pallas_call(
        kernel,
        out_shape=jax.ShapeDtypeStruct((S * B, n_pad), jnp.float32),
        in_specs=[vmem() for _ in range(5)],
        out_specs=vmem(),
    )(x_flat, w_ih_t, w_hh_t, bias, w_out_p)

    return y_pad[:, :V]


def _reference_forward(x, w_ih, w_hh, b_ih, b_hh, w_out):
    """Pure-JAX reference replicating torch.nn.LSTM + Linear(bias=False)."""
    S, B, V = x.shape
    H = w_hh.shape[1]

    def step(carry, x_t):
        h, c = carry
        gates = x_t @ w_ih.T + b_ih + h @ w_hh.T + b_hh
        i = jax.nn.sigmoid(gates[:, 0 * H:1 * H])
        f = jax.nn.sigmoid(gates[:, 1 * H:2 * H])
        g = jnp.tanh(gates[:, 2 * H:3 * H])
        o = jax.nn.sigmoid(gates[:, 3 * H:4 * H])
        c_new = f * c + i * g
        h_new = o * jnp.tanh(c_new)
        return (h_new, c_new), h_new

    init = (jnp.zeros((B, H), jnp.float32), jnp.zeros((B, H), jnp.float32))
    _, hs = jax.lax.scan(step, init, x)             # (S, B, H)
    return hs.reshape(S * B, H) @ w_out.T           # (S*B, V)


if __name__ == "__main__":
    # Small shapes implied by the module: seq=8, batch=2, vocab=16, hidden=32
    S, B, V, H = 8, 2, 16, 32

    key = jax.random.PRNGKey(0)
    k_x, k1, k2, k3, k4, k5 = jax.random.split(key, 6)

    # Deterministic parameter init (uniform +-1/sqrt(H), PyTorch-style).
    bound = 1.0 / jnp.sqrt(jnp.float32(H))
    w_ih = jax.random.uniform(k1, (4 * H, V), jnp.float32, -bound, bound)
    w_hh = jax.random.uniform(k2, (4 * H, H), jnp.float32, -bound, bound)
    b_ih = jax.random.uniform(k3, (4 * H,), jnp.float32, -bound, bound)
    b_hh = jax.random.uniform(k4, (4 * H,), jnp.float32, -bound, bound)
    w_out = jax.random.uniform(k5, (V, H), jnp.float32, -bound, bound)

    x = jax.random.normal(k_x, (S, B, V), jnp.float32)

    # One-time parameter prep (transposes / scales / casts / padding),
    # kept out of the per-call forward path.
    params = prepare_params(w_ih, w_hh, b_ih, b_hh, w_out)
    params = jax.block_until_ready(params)

    out = lstm_net_forward(x, *params)
    out = jax.block_until_ready(out)

    ref = _reference_forward(x, w_ih, w_hh, b_ih, b_hh, w_out)
    assert out.shape == (S * B, V), out.shape
    # Tolerance relaxed: recurrent matmul runs with bf16 operands (f32 accum).
    assert jnp.allclose(out, ref, atol=3e-2, rtol=3e-2), \
        float(jnp.max(jnp.abs(out - ref)))

    print("KERNEL_OK")
</pallas_src>

<mosaic_0001>
module attributes {stable_mosaic.version = 11 : i64} {
  func.func @_lstm_net_kernel(%arg0: memref<16x16xf32, #tpu.memory_space<vmem>>, %arg1: memref<16x128xf32, #tpu.memory_space<vmem>>, %arg2: memref<32x128xbf16, #tpu.memory_space<vmem>>, %arg3: memref<1x128xf32, #tpu.memory_space<vmem>>, %arg4: memref<32x128xf32, #tpu.memory_space<vmem>>, %arg5: memref<16x128xf32, #tpu.memory_space<vmem>>) attributes {dimension_semantics = [], scalar_prefetch = 0 : i64, scratch_operands = 0 : i64, tpu.core_type = #tpu.core_type<tc>} {
    %c0 = arith.constant 0 : index
    %c0_0 = arith.constant 0 : index
    %0 = vector.load %arg0[%c0, %c0_0] : memref<16x16xf32, #tpu.memory_space<vmem>>, vector<16x16xf32>
    %c0_1 = arith.constant 0 : index
    %c0_2 = arith.constant 0 : index
    %1 = vector.load %arg1[%c0_1, %c0_2] : memref<16x128xf32, #tpu.memory_space<vmem>>, vector<16x128xf32>
    %cst = arith.constant dense<0.000000e+00> : vector<16x128xf32>
    %2 = tpu.matmul %0, %1, %cst {dimension_numbers = #tpu.dot_dimension_numbers<[1], [0], [0], [1], [0, 0, 1, 1], [], []>} : vector<16x16xf32>, vector<16x128xf32>, vector<16x128xf32> -> vector<16x128xf32>
    %c0_3 = arith.constant 0 : index
    %c0_4 = arith.constant 0 : index
    %3 = vector.load %arg3[%c0_3, %c0_4] : memref<1x128xf32, #tpu.memory_space<vmem>>, vector<1x128xf32>
    %4 = vector.broadcast %3 : vector<1x128xf32> to vector<16x128xf32>
    %5 = arith.addf %2, %4 : vector<16x128xf32>
    %c0_5 = arith.constant 0 : index
    %c0_6 = arith.constant 0 : index
    %6 = vector.load %arg2[%c0_5, %c0_6] : memref<32x128xbf16, #tpu.memory_space<vmem>>, vector<32x128xbf16>
    %c0_7 = arith.constant 0 : index
    %c0_8 = arith.constant 0 : index
    %7 = vector.load %arg4[%c0_7, %c0_8] : memref<32x128xf32, #tpu.memory_space<vmem>>, vector<32x128xf32>
    %cst_9 = arith.constant 0.000000e+00 : f32
    %8 = vector.broadcast %cst_9 : f32 to vector<2x32xf32>
    %cst_10 = arith.constant 0.000000e+00 : f32
    %9 = vector.broadcast %cst_10 : f32 to vector<2x32xf32>
    %10 = vector.extract_strided_slice %5 {offsets = [0, 0], sizes = [2, 128], strides = [1, 1]} : vector<16x128xf32> to vector<2x128xf32>
    %11 = arith.truncf %8 : vector<2x32xf32> to vector<2x32xbf16>
    %cst_11 = arith.constant dense<0.000000e+00> : vector<2x128xf32>
    %12 = tpu.matmul %11, %6, %cst_11 {dimension_numbers = #tpu.dot_dimension_numbers<[1], [0], [0], [1], [0, 0, 1, 1], [], []>} : vector<2x32xbf16>, vector<32x128xbf16>, vector<2x128xf32> -> vector<2x128xf32>
    %13 = arith.addf %10, %12 : vector<2x128xf32>
    %14 = math.tanh %13 : vector<2x128xf32>
    %15 = vector.extract_strided_slice %14 {offsets = [0, 0], sizes = [2, 32], strides = [1, 1]} : vector<2x128xf32> to vector<2x32xf32>
    %16 = vector.extract_strided_slice %14 {offsets = [0, 32], sizes = [2, 32], strides = [1, 1]} : vector<2x128xf32> to vector<2x32xf32>
    %17 = vector.extract_strided_slice %14 {offsets = [0, 64], sizes = [2, 32], strides = [1, 1]} : vector<2x128xf32> to vector<2x32xf32>
    %18 = vector.extract_strided_slice %14 {offsets = [0, 96], sizes = [2, 32], strides = [1, 1]} : vector<2x128xf32> to vector<2x32xf32>
    %cst_12 = arith.constant 1.000000e+00 : f32
    %19 = vector.broadcast %cst_12 : f32 to vector<2x32xf32>
    %20 = arith.addf %16, %19 : vector<2x32xf32>
    %21 = arith.mulf %20, %9 : vector<2x32xf32>
    %cst_13 = arith.constant 1.000000e+00 : f32
    %22 = vector.broadcast %cst_13 : f32 to vector<2x32xf32>
    %23 = arith.addf %15, %22 : vector<2x32xf32>
    %24 = arith.mulf %23, %17 : vector<2x32xf32>
    %25 = arith.addf %21, %24 : vector<2x32xf32>
    %cst_14 = arith.constant 5.000000e-01 : f32
    %26 = vector.broadcast %cst_14 : f32 to vector<2x32xf32>
    %27 = arith.mulf %26, %25 : vector<2x32xf32>
    %cst_15 = arith.constant 1.000000e+00 : f32
    %28 = vector.broadcast %cst_15 : f32 to vector<2x32xf32>
    %29 = arith.addf %18, %28 : vector<2x32xf32>
    %cst_16 = arith.constant 5.000000e-01 : f32
    %30 = vector.broadcast %cst_16 : f32 to vector<2x32xf32>
    %31 = arith.mulf %30, %29 : vector<2x32xf32>
    %32 = math.tanh %27 : vector<2x32xf32>
    %33 = arith.mulf %31, %32 : vector<2x32xf32>
    %cst_17 = arith.constant dense<0.000000e+00> : vector<2x128xf32>
    %34 = tpu.matmul %33, %7, %cst_17 {dimension_numbers = #tpu.dot_dimension_numbers<[1], [0], [0], [1], [0, 0, 1, 1], [], []>} : vector<2x32xf32>, vector<32x128xf32>, vector<2x128xf32> -> vector<2x128xf32>
    %c0_18 = arith.constant 0 : index
    %c0_19 = arith.constant 0 : index
    %35 = vector.load %arg5[%c0_18, %c0_19] : memref<16x128xf32, #tpu.memory_space<vmem>>, vector<2x128xf32>
    tpu.vector_store %arg5[%c0_18, %c0_19], %34 {strides = array<i32>} : memref<16x128xf32, #tpu.memory_space<vmem>>, vector<2x128xf32>,
    %36 = vector.extract_strided_slice %5 {offsets = [2, 0], sizes = [2, 128], strides = [1, 1]} : vector<16x128xf32> to vector<2x128xf32>
    %37 = arith.truncf %33 : vector<2x32xf32> to vector<2x32xbf16>
    %cst_20 = arith.constant dense<0.000000e+00> : vector<2x128xf32>
    %38 = tpu.matmul %37, %6, %cst_20 {dimension_numbers = #tpu.dot_dimension_numbers<[1], [0], [0], [1], [0, 0, 1, 1], [], []>} : vector<2x32xbf16>, vector<32x128xbf16>, vector<2x128xf32> -> vector<2x128xf32>
    %39 = arith.addf %36, %38 : vector<2x128xf32>
    %40 = math.tanh %39 : vector<2x128xf32>
    %41 = vector.extract_strided_slice %40 {offsets = [0, 0], sizes = [2, 32], strides = [1, 1]} : vector<2x128xf32> to vector<2x32xf32>
    %42 = vector.extract_strided_slice %40 {offsets = [0, 32], sizes = [2, 32], strides = [1, 1]} : vector<2x128xf32> to vector<2x32xf32>
    %43 = vector.extract_strided_slice %40 {offsets = [0, 64], sizes = [2, 32], strides = [1, 1]} : vector<2x128xf32> to vector<2x32xf32>
    %44 = vector.extract_strided_slice %40 {offsets = [0, 96], sizes = [2, 32], strides = [1, 1]} : vector<2x128xf32> to vector<2x32xf32>
    %cst_21 = arith.constant 1.000000e+00 : f32
    %45 = vector.broadcast %cst_21 : f32 to vector<2x32xf32>
    %46 = arith.addf %42, %45 : vector<2x32xf32>
    %47 = arith.mulf %46, %27 : vector<2x32xf32>
    %cst_22 = arith.constant 1.000000e+00 : f32
    %48 = vector.broadcast %cst_22 : f32 to vector<2x32xf32>
    %49 = arith.addf %41, %48 : vector<2x32xf32>
    %50 = arith.mulf %49, %43 : vector<2x32xf32>
    %51 = arith.addf %47, %50 : vector<2x32xf32>
    %cst_23 = arith.constant 5.000000e-01 : f32
    %52 = vector.broadcast %cst_23 : f32 to vector<2x32xf32>
    %53 = arith.mulf %52, %51 : vector<2x32xf32>
    %cst_24 = arith.constant 1.000000e+00 : f32
    %54 = vector.broadcast %cst_24 : f32 to vector<2x32xf32>
    %55 = arith.addf %44, %54 : vector<2x32xf32>
    %cst_25 = arith.constant 5.000000e-01 : f32
    %56 = vector.broadcast %cst_25 : f32 to vector<2x32xf32>
    %57 = arith.mulf %56, %55 : vector<2x32xf32>
    %58 = math.tanh %53 : vector<2x32xf32>
    %59 = arith.mulf %57, %58 : vector<2x32xf32>
    %cst_26 = arith.constant dense<0.000000e+00> : vector<2x128xf32>
    %60 = tpu.matmul %59, %7, %cst_26 {dimension_numbers = #tpu.dot_dimension_numbers<[1], [0], [0], [1], [0, 0, 1, 1], [], []>} : vector<2x32xf32>, vector<32x128xf32>, vector<2x128xf32> -> vector<2x128xf32>
    %c2 = arith.constant 2 : index
    %c0_27 = arith.constant 0 : index
    %61 = vector.load %arg5[%c2, %c0_27] : memref<16x128xf32, #tpu.memory_space<vmem>>, vector<2x128xf32>
    tpu.vector_store %arg5[%c2, %c0_27], %60 {strides = array<i32>} : memref<16x128xf32, #tpu.memory_space<vmem>>, vector<2x128xf32>,
    %62 = vector.extract_strided_slice %5 {offsets = [4, 0], sizes = [2, 128], strides = [1, 1]} : vector<16x128xf32> to vector<2x128xf32>
    %63 = arith.truncf %59 : vector<2x32xf32> to vector<2x32xbf16>
    %cst_28 = arith.constant dense<0.000000e+00> : vector<2x128xf32>
    %64 = tpu.matmul %63, %6, %cst_28 {dimension_numbers = #tpu.dot_dimension_numbers<[1], [0], [0], [1], [0, 0, 1, 1], [], []>} : vector<2x32xbf16>, vector<32x128xbf16>, vector<2x128xf32> -> vector<2x128xf32>
    %65 = arith.addf %62, %64 : vector<2x128xf32>
    %66 = math.tanh %65 : vector<2x128xf32>
    %67 = vector.extract_strided_slice %66 {offsets = [0, 0], sizes = [2, 32], strides = [1, 1]} : vector<2x128xf32> to vector<2x32xf32>
    %68 = vector.extract_strided_slice %66 {offsets = [0, 32], sizes = [2, 32], strides = [1, 1]} : vector<2x128xf32> to vector<2x32xf32>
    %69 = vector.extract_strided_slice %66 {offsets = [0, 64], sizes = [2, 32], strides = [1, 1]} : vector<2x128xf32> to vector<2x32xf32>
    %70 = vector.extract_strided_slice %66 {offsets = [0, 96], sizes = [2, 32], strides = [1, 1]} : vector<2x128xf32> to vector<2x32xf32>
    %cst_29 = arith.constant 1.000000e+00 : f32
    %71 = vector.broadcast %cst_29 : f32 to vector<2x32xf32>
    %72 = arith.addf %68, %71 : vector<2x32xf32>
    %73 = arith.mulf %72, %53 : vector<2x32xf32>
    %cst_30 = arith.constant 1.000000e+00 : f32
    %74 = vector.broadcast %cst_30 : f32 to vector<2x32xf32>
    %75 = arith.addf %67, %74 : vector<2x32xf32>
    %76 = arith.mulf %75, %69 : vector<2x32xf32>
    %77 = arith.addf %73, %76 : vector<2x32xf32>
    %cst_31 = arith.constant 5.000000e-01 : f32
    %78 = vector.broadcast %cst_31 : f32 to vector<2x32xf32>
    %79 = arith.mulf %78, %77 : vector<2x32xf32>
    %cst_32 = arith.constant 1.000000e+00 : f32
    %80 = vector.broadcast %cst_32 : f32 to vector<2x32xf32>
    %81 = arith.addf %70, %80 : vector<2x32xf32>
    %cst_33 = arith.constant 5.000000e-01 : f32
    %82 = vector.broadcast %cst_33 : f32 to vector<2x32xf32>
    %83 = arith.mulf %82, %81 : vector<2x32xf32>
    %84 = math.tanh %79 : vector<2x32xf32>
    %85 = arith.mulf %83, %84 : vector<2x32xf32>
    %cst_34 = arith.constant dense<0.000000e+00> : vector<2x128xf32>
    %86 = tpu.matmul %85, %7, %cst_34 {dimension_numbers = #tpu.dot_dimension_numbers<[1], [0], [0], [1], [0, 0, 1, 1], [], []>} : vector<2x32xf32>, vector<32x128xf32>, vector<2x128xf32> -> vector<2x128xf32>
    %c4 = arith.constant 4 : index
    %c0_35 = arith.constant 0 : index
    %87 = vector.load %arg5[%c4, %c0_35] : memref<16x128xf32, #tpu.memory_space<vmem>>, vector<2x128xf32>
    tpu.vector_store %arg5[%c4, %c0_35], %86 {strides = array<i32>} : memref<16x128xf32, #tpu.memory_space<vmem>>, vector<2x128xf32>,
    %88 = vector.extract_strided_slice %5 {offsets = [6, 0], sizes = [2, 128], strides = [1, 1]} : vector<16x128xf32> to vector<2x128xf32>
    %89 = arith.truncf %85 : vector<2x32xf32> to vector<2x32xbf16>
    %cst_36 = arith.constant dense<0.000000e+00> : vector<2x128xf32>
    %90 = tpu.matmul %89, %6, %cst_36 {dimension_numbers = #tpu.dot_dimension_numbers<[1], [0], [0], [1], [0, 0, 1, 1], [], []>} : vector<2x32xbf16>, vector<32x128xbf16>, vector<2x128xf32> -> vector<2x128xf32>
    %91 = arith.addf %88, %90 : vector<2x128xf32>
    %92 = math.tanh %91 : vector<2x128xf32>
    %93 = vector.extract_strided_slice %92 {offsets = [0, 0], sizes = [2, 32], strides = [1, 1]} : vector<2x128xf32> to vector<2x32xf32>
    %94 = vector.extract_strided_slice %92 {offsets = [0, 32], sizes = [2, 32], strides = [1, 1]} : vector<2x128xf32> to vector<2x32xf32>
    %95 = vector.extract_strided_slice %92 {offsets = [0, 64], sizes = [2, 32], strides = [1, 1]} : vector<2x128xf32> to vector<2x32xf32>
    %96 = vector.extract_strided_slice %92 {offsets = [0, 96], sizes = [2, 32], strides = [1, 1]} : vector<2x128xf32> to vector<2x32xf32>
    %cst_37 = arith.constant 1.000000e+00 : f32
    %97 = vector.broadcast %cst_37 : f32 to vector<2x32xf32>
    %98 = arith.addf %94, %97 : vector<2x32xf32>
    %99 = arith.mulf %98, %79 : vector<2x32xf32>
    %cst_38 = arith.constant 1.000000e+00 : f32
    %100 = vector.broadcast %cst_38 : f32 to vector<2x32xf32>
    %101 = arith.addf %93, %100 : vector<2x32xf32>
    %102 = arith.mulf %101, %95 : vector<2x32xf32>
    %103 = arith.addf %99, %102 : vector<2x32xf32>
    %cst_39 = arith.constant 5.000000e-01 : f32
    %104 = vector.broadcast %cst_39 : f32 to vector<2x32xf32>
    %105 = arith.mulf %104, %103 : vector<2x32xf32>
    %cst_40 = arith.constant 1.000000e+00 : f32
    %106 = vector.broadcast %cst_40 : f32 to vector<2x32xf32>
    %107 = arith.addf %96, %106 : vector<2x32xf32>
    %cst_41 = arith.constant 5.000000e-01 : f32
    %108 = vector.broadcast %cst_41 : f32 to vector<2x32xf32>
    %109 = arith.mulf %108, %107 : vector<2x32xf32>
    %110 = math.tanh %105 : vector<2x32xf32>
    %111 = arith.mulf %109, %110 : vector<2x32xf32>
    %cst_42 = arith.constant dense<0.000000e+00> : vector<2x128xf32>
    %112 = tpu.matmul %111, %7, %cst_42 {dimension_numbers = #tpu.dot_dimension_numbers<[1], [0], [0], [1], [0, 0, 1, 1], [], []>} : vector<2x32xf32>, vector<32x128xf32>, vector<2x128xf32> -> vector<2x128xf32>
    %c6 = arith.constant 6 : index
    %c0_43 = arith.constant 0 : index
    %113 = vector.load %arg5[%c6, %c0_43] : memref<16x128xf32, #tpu.memory_space<vmem>>, vector<2x128xf32>
    tpu.vector_store %arg5[%c6, %c0_43], %112 {strides = array<i32>} : memref<16x128xf32, #tpu.memory_space<vmem>>, vector<2x128xf32>,
    %114 = vector.extract_strided_slice %5 {offsets = [8, 0], sizes = [2, 128], strides = [1, 1]} : vector<16x128xf32> to vector<2x128xf32>
    %115 = arith.truncf %111 : vector<2x32xf32> to vector<2x32xbf16>
    %cst_44 = arith.constant dense<0.000000e+00> : vector<2x128xf32>
    %116 = tpu.matmul %115, %6, %cst_44 {dimension_numbers = #tpu.dot_dimension_numbers<[1], [0], [0], [1], [0, 0, 1, 1], [], []>} : vector<2x32xbf16>, vector<32x128xbf16>, vector<2x128xf32> -> vector<2x128xf32>
    %117 = arith.addf %114, %116 : vector<2x128xf32>
    %118 = math.tanh %117 : vector<2x128xf32>
    %119 = vector.extract_strided_slice %118 {offsets = [0, 0], sizes = [2, 32], strides = [1, 1]} : vector<2x128xf32> to vector<2x32xf32>
    %120 = vector.extract_strided_slice %118 {offsets = [0, 32], sizes = [2, 32], strides = [1, 1]} : vector<2x128xf32> to vector<2x32xf32>
    %121 = vector.extract_strided_slice %118 {offsets = [0, 64], sizes = [2, 32], strides = [1, 1]} : vector<2x128xf32> to vector<2x32xf32>
    %122 = vector.extract_strided_slice %118 {offsets = [0, 96], sizes = [2, 32], strides = [1, 1]} : vector<2x128xf32> to vector<2x32xf32>
    %cst_45 = arith.constant 1.000000e+00 : f32
    %123 = vector.broadcast %cst_45 : f32 to vector<2x32xf32>
    %124 = arith.addf %120, %123 : vector<2x32xf32>
    %125 = arith.mulf %124, %105 : vector<2x32xf32>
    %cst_46 = arith.constant 1.000000e+00 : f32
    %126 = vector.broadcast %cst_46 : f32 to vector<2x32xf32>
    %127 = arith.addf %119, %126 : vector<2x32xf32>
    %128 = arith.mulf %127, %121 : vector<2x32xf32>
    %129 = arith.addf %125, %128 : vector<2x32xf32>
    %cst_47 = arith.constant 5.000000e-01 : f32
    %130 = vector.broadcast %cst_47 : f32 to vector<2x32xf32>
    %131 = arith.mulf %130, %129 : vector<2x32xf32>
    %cst_48 = arith.constant 1.000000e+00 : f32
    %132 = vector.broadcast %cst_48 : f32 to vector<2x32xf32>
    %133 = arith.addf %122, %132 : vector<2x32xf32>
    %cst_49 = arith.constant 5.000000e-01 : f32
    %134 = vector.broadcast %cst_49 : f32 to vector<2x32xf32>
    %135 = arith.mulf %134, %133 : vector<2x32xf32>
    %136 = math.tanh %131 : vector<2x32xf32>
    %137 = arith.mulf %135, %136 : vector<2x32xf32>
    %cst_50 = arith.constant dense<0.000000e+00> : vector<2x128xf32>
    %138 = tpu.matmul %137, %7, %cst_50 {dimension_numbers = #tpu.dot_dimension_numbers<[1], [0], [0], [1], [0, 0, 1, 1], [], []>} : vector<2x32xf32>, vector<32x128xf32>, vector<2x128xf32> -> vector<2x128xf32>
    %c8 = arith.constant 8 : index
    %c0_51 = arith.constant 0 : index
    %139 = vector.load %arg5[%c8, %c0_51] : memref<16x128xf32, #tpu.memory_space<vmem>>, vector<2x128xf32>
    tpu.vector_store %arg5[%c8, %c0_51], %138 {strides = array<i32>} : memref<16x128xf32, #tpu.memory_space<vmem>>, vector<2x128xf32>,
    %140 = vector.extract_strided_slice %5 {offsets = [10, 0], sizes = [2, 128], strides = [1, 1]} : vector<16x128xf32> to vector<2x128xf32>
    %141 = arith.truncf %137 : vector<2x32xf32> to vector<2x32xbf16>
    %cst_52 = arith.constant dense<0.000000e+00> : vector<2x128xf32>
    %142 = tpu.matmul %141, %6, %cst_52 {dimension_numbers = #tpu.dot_dimension_numbers<[1], [0], [0], [1], [0, 0, 1, 1], [], []>} : vector<2x32xbf16>, vector<32x128xbf16>, vector<2x128xf32> -> vector<2x128xf32>
    %143 = arith.addf %140, %142 : vector<2x128xf32>
    %144 = math.tanh %143 : vector<2x128xf32>
    %145 = vector.extract_strided_slice %144 {offsets = [0, 0], sizes = [2, 32], strides = [1, 1]} : vector<2x128xf32> to vector<2x32xf32>
    %146 = vector.extract_strided_slice %144 {offsets = [0, 32], sizes = [2, 32], strides = [1, 1]} : vector<2x128xf32> to vector<2x32xf32>
    %147 = vector.extract_strided_slice %144 {offsets = [0, 64], sizes = [2, 32], strides = [1, 1]} : vector<2x128xf32> to vector<2x32xf32>
    %148 = vector.extract_strided_slice %144 {offsets = [0, 96], sizes = [2, 32], strides = [1, 1]} : vector<2x128xf32> to vector<2x32xf32>
    %cst_53 = arith.constant 1.000000e+00 : f32
    %149 = vector.broadcast %cst_53 : f32 to vector<2x32xf32>
    %150 = arith.addf %146, %149 : vector<2x32xf32>
    %151 = arith.mulf %150, %131 : vector<2x32xf32>
    %cst_54 = arith.constant 1.000000e+00 : f32
    %152 = vector.broadcast %cst_54 : f32 to vector<2x32xf32>
    %153 = arith.addf %145, %152 : vector<2x32xf32>
    %154 = arith.mulf %153, %147 : vector<2x32xf32>
    %155 = arith.addf %151, %154 : vector<2x32xf32>
    %cst_55 = arith.constant 5.000000e-01 : f32
    %156 = vector.broadcast %cst_55 : f32 to vector<2x32xf32>
    %157 = arith.mulf %156, %155 : vector<2x32xf32>
    %cst_56 = arith.constant 1.000000e+00 : f32
    %158 = vector.broadcast %cst_56 : f32 to vector<2x32xf32>
    %159 = arith.addf %148, %158 : vector<2x32xf32>
    %cst_57 = arith.constant 5.000000e-01 : f32
    %160 = vector.broadcast %cst_57 : f32 to vector<2x32xf32>
    %161 = arith.mulf %160, %159 : vector<2x32xf32>
    %162 = math.tanh %157 : vector<2x32xf32>
    %163 = arith.mulf %161, %162 : vector<2x32xf32>
    %cst_58 = arith.constant dense<0.000000e+00> : vector<2x128xf32>
    %164 = tpu.matmul %163, %7, %cst_58 {dimension_numbers = #tpu.dot_dimension_numbers<[1], [0], [0], [1], [0, 0, 1, 1], [], []>} : vector<2x32xf32>, vector<32x128xf32>, vector<2x128xf32> -> vector<2x128xf32>
    %c10 = arith.constant 10 : index
    %c0_59 = arith.constant 0 : index
    %165 = vector.load %arg5[%c10, %c0_59] : memref<16x128xf32, #tpu.memory_space<vmem>>, vector<2x128xf32>
    tpu.vector_store %arg5[%c10, %c0_59], %164 {strides = array<i32>} : memref<16x128xf32, #tpu.memory_space<vmem>>, vector<2x128xf32>,
    %166 = vector.extract_strided_slice %5 {offsets = [12, 0], sizes = [2, 128], strides = [1, 1]} : vector<16x128xf32> to vector<2x128xf32>
    %167 = arith.truncf %163 : vector<2x32xf32> to vector<2x32xbf16>
    %cst_60 = arith.constant dense<0.000000e+00> : vector<2x128xf32>
    %168 = tpu.matmul %167, %6, %cst_60 {dimension_numbers = #tpu.dot_dimension_numbers<[1], [0], [0], [1], [0, 0, 1, 1], [], []>} : vector<2x32xbf16>, vector<32x128xbf16>, vector<2x128xf32> -> vector<2x128xf32>
    %169 = arith.addf %166, %168 : vector<2x128xf32>
    %170 = math.tanh %169 : vector<2x128xf32>
    %171 = vector.extract_strided_slice %170 {offsets = [0, 0], sizes = [2, 32], strides = [1, 1]} : vector<2x128xf32> to vector<2x32xf32>
    %172 = vector.extract_strided_slice %170 {offsets = [0, 32], sizes = [2, 32], strides = [1, 1]} : vector<2x128xf32> to vector<2x32xf32>
    %173 = vector.extract_strided_slice %170 {offsets = [0, 64], sizes = [2, 32], strides = [1, 1]} : vector<2x128xf32> to vector<2x32xf32>
    %174 = vector.extract_strided_slice %170 {offsets = [0, 96], sizes = [2, 32], strides = [1, 1]} : vector<2x128xf32> to vector<2x32xf32>
    %cst_61 = arith.constant 1.000000e+00 : f32
    %175 = vector.broadcast %cst_61 : f32 to vector<2x32xf32>
    %176 = arith.addf %172, %175 : vector<2x32xf32>
    %177 = arith.mulf %176, %157 : vector<2x32xf32>
    %cst_62 = arith.constant 1.000000e+00 : f32
    %178 = vector.broadcast %cst_62 : f32 to vector<2x32xf32>
    %179 = arith.addf %171, %178 : vector<2x32xf32>
    %180 = arith.mulf %179, %173 : vector<2x32xf32>
    %181 = arith.addf %177, %180 : vector<2x32xf32>
    %cst_63 = arith.constant 5.000000e-01 : f32
    %182 = vector.broadcast %cst_63 : f32 to vector<2x32xf32>
    %183 = arith.mulf %182, %181 : vector<2x32xf32>
    %cst_64 = arith.constant 1.000000e+00 : f32
    %184 = vector.broadcast %cst_64 : f32 to vector<2x32xf32>
    %185 = arith.addf %174, %184 : vector<2x32xf32>
    %cst_65 = arith.constant 5.000000e-01 : f32
    %186 = vector.broadcast %cst_65 : f32 to vector<2x32xf32>
    %187 = arith.mulf %186, %185 : vector<2x32xf32>
    %188 = math.tanh %183 : vector<2x32xf32>
    %189 = arith.mulf %187, %188 : vector<2x32xf32>
    %cst_66 = arith.constant dense<0.000000e+00> : vector<2x128xf32>
    %190 = tpu.matmul %189, %7, %cst_66 {dimension_numbers = #tpu.dot_dimension_numbers<[1], [0], [0], [1], [0, 0, 1, 1], [], []>} : vector<2x32xf32>, vector<32x128xf32>, vector<2x128xf32> -> vector<2x128xf32>
    %c12 = arith.constant 12 : index
    %c0_67 = arith.constant 0 : index
    %191 = vector.load %arg5[%c12, %c0_67] : memref<16x128xf32, #tpu.memory_space<vmem>>, vector<2x128xf32>
    tpu.vector_store %arg5[%c12, %c0_67], %190 {strides = array<i32>} : memref<16x128xf32, #tpu.memory_space<vmem>>, vector<2x128xf32>,
    %192 = vector.extract_strided_slice %5 {offsets = [14, 0], sizes = [2, 128], strides = [1, 1]} : vector<16x128xf32> to vector<2x128xf32>
    %193 = arith.truncf %189 : vector<2x32xf32> to vector<2x32xbf16>
    %cst_68 = arith.constant dense<0.000000e+00> : vector<2x128xf32>
    %194 = tpu.matmul %193, %6, %cst_68 {dimension_numbers = #tpu.dot_dimension_numbers<[1], [0], [0], [1], [0, 0, 1, 1], [], []>} : vector<2x32xbf16>, vector<32x128xbf16>, vector<2x128xf32> -> vector<2x128xf32>
    %195 = arith.addf %192, %194 : vector<2x128xf32>
    %196 = math.tanh %195 : vector<2x128xf32>
    %197 = vector.extract_strided_slice %196 {offsets = [0, 0], sizes = [2, 32], strides = [1, 1]} : vector<2x128xf32> to vector<2x32xf32>
    %198 = vector.extract_strided_slice %196 {offsets = [0, 32], sizes = [2, 32], strides = [1, 1]} : vector<2x128xf32> to vector<2x32xf32>
    %199 = vector.extract_strided_slice %196 {offsets = [0, 64], sizes = [2, 32], strides = [1, 1]} : vector<2x128xf32> to vector<2x32xf32>
    %200 = vector.extract_strided_slice %196 {offsets = [0, 96], sizes = [2, 32], strides = [1, 1]} : vector<2x128xf32> to vector<2x32xf32>
    %cst_69 = arith.constant 1.000000e+00 : f32
    %201 = vector.broadcast %cst_69 : f32 to vector<2x32xf32>
    %202 = arith.addf %198, %201 : vector<2x32xf32>
    %203 = arith.mulf %202, %183 : vector<2x32xf32>
    %cst_70 = arith.constant 1.000000e+00 : f32
    %204 = vector.broadcast %cst_70 : f32 to vector<2x32xf32>
    %205 = arith.addf %197, %204 : vector<2x32xf32>
    %206 = arith.mulf %205, %199 : vector<2x32xf32>
    %207 = arith.addf %203, %206 : vector<2x32xf32>
    %cst_71 = arith.constant 5.000000e-01 : f32
    %208 = vector.broadcast %cst_71 : f32 to vector<2x32xf32>
    %209 = arith.mulf %208, %207 : vector<2x32xf32>
    %cst_72 = arith.constant 1.000000e+00 : f32
    %210 = vector.broadcast %cst_72 : f32 to vector<2x32xf32>
    %211 = arith.addf %200, %210 : vector<2x32xf32>
    %cst_73 = arith.constant 5.000000e-01 : f32
    %212 = vector.broadcast %cst_73 : f32 to vector<2x32xf32>
    %213 = arith.mulf %212, %211 : vector<2x32xf32>
    %214 = math.tanh %209 : vector<2x32xf32>
    %215 = arith.mulf %213, %214 : vector<2x32xf32>
    %cst_74 = arith.constant dense<0.000000e+00> : vector<2x128xf32>
    %216 = tpu.matmul %215, %7, %cst_74 {dimension_numbers = #tpu.dot_dimension_numbers<[1], [0], [0], [1], [0, 0, 1, 1], [], []>} : vector<2x32xf32>, vector<32x128xf32>, vector<2x128xf32> -> vector<2x128xf32>
    %c14 = arith.constant 14 : index
    %c0_75 = arith.constant 0 : index
    %217 = vector.load %arg5[%c14, %c0_75] : memref<16x128xf32, #tpu.memory_space<vmem>>, vector<2x128xf32>
    tpu.vector_store %arg5[%c14, %c0_75], %216 {strides = array<i32>} : memref<16x128xf32, #tpu.memory_space<vmem>>, vector<2x128xf32>,
    return
  }
}

</mosaic_0001>

<llo_original>
// kernel: lstm_net_forward.1
$region0: #{lstm_net_forward.1}
  #allocation0 [shape = 'u32[]', space=smem, size = 0x4, offset = 0x4, fixed_abs, tag = 'smem constant byte address 0x4 - core index']
  #allocation1 [shape = 'u32[72,128]{1,0:T(1,128)}', space=vmem, size = 0x9000, scoped, tag = 'internal scratch']
  %s0 = inlined_call_operand.hbm [shape: f32[16,16], index: 0, kind: input, shape index: {}]
  %s1 = inlined_call_operand.hbm [shape: f32[16,128], index: 1, kind: input, shape index: {}]
  %s2 = inlined_call_operand.hbm [shape: bf16[32,128], index: 2, kind: input, shape index: {}]
  %s3 = inlined_call_operand.vmem [shape: f32[1,128], index: 3, kind: input, shape index: {}]
  %s4 = inlined_call_operand.hbm [shape: f32[32,128], index: 4, kind: input, shape index: {}]
  %s5 = inlined_call_operand.hbm [shape: f32[16,128], index: 5, kind: output, shape index: {}]
  %s6 = sld [smem:[#allocation0]]
  $region46: #{lstm_net_forward.1} parent=0
    _
  %s8 = ssub.s32 1, %s6
  %s9 = scalar_select 0, %s8, %s6
  $region1: #{lstm_net_forward.1} parent=0
    #allocation2 [shape = 'u8[8192]{0}', space=vmem, size = 0x2000, scoped, tag = 'input window, operand 0, single buffered']
    #allocation3 [shape = 's32[1]{0}', space=sflag, size = 0x4, scoped, tag = 'scoped memory for lstm_net_forward.1']
    #allocation4 [shape = 's32[1]{0}', space=sflag, size = 0x4, scoped, tag = 'scoped memory for lstm_net_forward.1']
    #allocation5 [shape = 'u8[8192]{0}', space=vmem, size = 0x2000, scoped, tag = 'input window, operand 1, single buffered']
    #allocation6 [shape = 's32[1]{0}', space=sflag, size = 0x4, scoped, tag = 'scoped memory for lstm_net_forward.1']
    #allocation7 [shape = 'u8[8192]{0}', space=vmem, size = 0x2000, scoped, tag = 'input window, operand 2, single buffered']
    #allocation8 [shape = 'u8[16384]{0}', space=vmem, size = 0x4000, scoped, tag = 'input window, operand 4, single buffered']
    #allocation9 [shape = 's32[1]{0}', space=sflag, size = 0x4, scoped, tag = 'scoped memory for lstm_net_forward.1']
    #allocation10 [shape = 'u8[8192]{0}', space=vmem, size = 0x2000, scoped, tag = 'output window, operand 0, single buffered']
    %10 = vsyncpa [#allocation3], 0
    %11 = vsyncpa [#allocation6], 0
    %12 = vsyncpa [#allocation9], 0
    %13 = vsyncpa [#allocation4], 0
    // Predicated region
    $region2: #{lstm_net_forward.1} parent=1 // pred_check
      _
    $region3: #{lstm_net_forward.1} parent=1 // pred_check_branch
      %15 = sbr.rel (0) target = $region5
    $region4: #{lstm_net_forward.1} parent=1 // pred_region
      %17 = vsyncadd [#allocation3], 0
      %s18 = sshll.u32 %s0, 4
      %s19 = int_to_ptr.hbm [resolvable:$true] %s18
      %s20 = sshll.u32 [#allocation2], 4
      %s21 = int_to_ptr.vmem [resolvable:$true] %s20
      %26 = dma.hbm_to_vmem [thread:$0]  %s19, 256, %s21, [#allocation3], 128, 128, 8
    $region5: #{lstm_net_forward.1} parent=1 // pred_fallthru
      _
    // Predicated region
    $region6: #{lstm_net_forward.1} parent=1 // pred_check
      _
    $region7: #{lstm_net_forward.1} parent=1 // pred_check_branch
      %28 = sbr.rel (0) target = $region9
    $region8: #{lstm_net_forward.1} parent=1 // pred_region
      %30 = vsyncadd [#allocation6], 0
      %s31 = sshll.u32 %s1, 4
      %s32 = int_to_ptr.hbm [resolvable:$true] %s31
      %s33 = sshll.u32 [#allocation5], 4
      %s34 = int_to_ptr.vmem [resolvable:$true] %s33
      %39 = dma.hbm_to_vmem [thread:$0]  %s32, 256, %s34, [#allocation6], 128, 128, 8
    $region9: #{lstm_net_forward.1} parent=1 // pred_fallthru
      _
    // Predicated region
    $region10: #{lstm_net_forward.1} parent=1 // pred_check
      _
    $region11: #{lstm_net_forward.1} parent=1 // pred_check_branch
      %41 = sbr.rel (0) target = $region13
    $region12: #{lstm_net_forward.1} parent=1 // pred_region
      %43 = vsyncadd [#allocation6], 0
      %s44 = sshll.u32 %s2, 4
      %s45 = int_to_ptr.hbm [resolvable:$true] %s44
      %s46 = sshll.u32 [#allocation7], 4
      %s47 = int_to_ptr.vmem [resolvable:$true] %s46
      %52 = dma.hbm_to_vmem [thread:$0]  %s45, 256, %s47, [#allocation6], 64, 64, 4
    $region13: #{lstm_net_forward.1} parent=1 // pred_fallthru
      _
    // Predicated region
    $region14: #{lstm_net_forward.1} parent=1 // pred_check
      _
    $region15: #{lstm_net_forward.1} parent=1 // pred_check_branch
      %54 = sbr.rel (0) target = $region17
    $region16: #{lstm_net_forward.1} parent=1 // pred_region
      _
    $region17: #{lstm_net_forward.1} parent=1 // pred_fallthru
      _
    // Predicated region
    $region18: #{lstm_net_forward.1} parent=1 // pred_check
      _
    $region19: #{lstm_net_forward.1} parent=1 // pred_check_branch
      %56 = sbr.rel (0) target = $region21
    $region20: #{lstm_net_forward.1} parent=1 // pred_region
      %58 = vsyncadd [#allocation9], 0
      %s59 = sshll.u32 %s4, 4
      %s60 = int_to_ptr.hbm [resolvable:$true] %s59
      %s61 = sshll.u32 [#allocation8], 4
      %s62 = int_to_ptr.vmem [resolvable:$true] %s61
      %67 = dma.hbm_to_vmem [thread:$0]  %s60, 512, %s62, [#allocation9], 128, 128, 8
    $region21: #{lstm_net_forward.1} parent=1 // pred_fallthru
      _
    // Predicated region
    $region22: #{lstm_net_forward.1} parent=1 // pred_check
      _
    $region23: #{lstm_net_forward.1} parent=1 // pred_check_branch
      %69 = sbr.rel (0) target = $region25
    $region24: #{lstm_net_forward.1} parent=1 // pred_region
      %71 = dma.done [#allocation3], 256
    $region25: #{lstm_net_forward.1} parent=1 // pred_fallthru
      _
    // Predicated region
    $region26: #{lstm_net_forward.1} parent=1 // pred_check
      _
    $region27: #{lstm_net_forward.1} parent=1 // pred_check_branch
      %73 = sbr.rel (0) target = $region29
    $region28: #{lstm_net_forward.1} parent=1 // pred_region
      %75 = dma.done [#allocation6], 256
    $region29: #{lstm_net_forward.1} parent=1 // pred_fallthru
      _
    // Predicated region
    $region30: #{lstm_net_forward.1} parent=1 // pred_check
      _
    $region31: #{lstm_net_forward.1} parent=1 // pred_check_branch
      %77 = sbr.rel (0) target = $region33
    $region32: #{lstm_net_forward.1} parent=1 // pred_region
      %79 = dma.done [#allocation6], 256
    $region33: #{lstm_net_forward.1} parent=1 // pred_fallthru
      _
    // Predicated region
    $region34: #{lstm_net_forward.1} parent=1 // pred_check
      _
    $region35: #{lstm_net_forward.1} parent=1 // pred_check_branch
      %81 = sbr.rel (0) target = $region37
    $region36: #{lstm_net_forward.1} parent=1 // pred_region
      %83 = dma.done [#allocation9], 512
    $region37: #{lstm_net_forward.1} parent=1 // pred_fallthru
      _
    %v85 = vld [vmem:[#allocation2] sm:$0xff]
    %v86 = vld [vmem:[#allocation2 + $0x8] sm:$0xff]
    %v87 = vld [vmem:[#allocation5] sm:$0xff]
    %v88 = vld [vmem:[#allocation5 + $0x8] sm:$0xff]
    %v89 = vld [vmem:[%s3] sm:$0x1]
    %v91 = vperm.slane %v89, 0
    %vm93 = vcmask 130048
    %v95 = vsel %vm93, %v85, 0
    %v98 = vsel %vm93, %v86, 0
    %100 = vmatpush.msra.mxu0 0.0
    %101 = vmatpush.msra.mxu0 0.0
    %102 = vmatpush.msra.mxu0 0.0
    %103 = vmatpush.msra.mxu0 0.0
    %104 = vmatpush.msra.mxu0 0.0
    %105 = vmatpush.msra.mxu0 0.0
    %106 = vmatpush.msra.mxu0 0.0
    %107 = vmatpush.msra.mxu0 0.0
    %108 = vmatpush.msra.mxu0 0.0
    %109 = vmatpush.msra.mxu0 0.0
    %110 = vmatpush.msra.mxu0 0.0
    %111 = vmatpush.msra.mxu0 0.0
    %112 = vmatpush.msra.mxu0 0.0
    %113 = vmatpush.msra.mxu0 0.0
    %114 = vmatpush.msra.mxu0 %v88
    %115 = vmatpush.msra.mxu0 %v87
    %116 = vmatmul.f32.gmra.mxu0 %v95
    %v117 = vpop.f32.mrf.mxu0
    %v118 = vadd.f32 %v91, %v117
    %119 = vmatmul.f32.gmra.mxu0 %v98
    %v120 = vpop.f32.mrf.mxu0
    %v121 = vadd.f32 %v91, %v120
    %122 = vdwg.mxu0
    %v123 = vld [vmem:[#allocation7] sm:$0xf]
    %v124 = vld [vmem:[#allocation7 + $0x4] sm:$0xf]
    %v125 = vld [vmem:[#allocation7 + $0x8] sm:$0xf]
    %v126 = vld [vmem:[#allocation7 + $0xc] sm:$0xf]
    %v127 = vld [vmem:[#allocation8] sm:$0xff]
    %v128 = vld [vmem:[#allocation8 + $0x8] sm:$0xff]
    %v129 = vld [vmem:[#allocation8 + $0x10] sm:$0xff]
    %v130 = vld [vmem:[#allocation8 + $0x18] sm:$0xff]
    %v135 = vunpack.c.l.b16 %v123
    %v136 = vunpack.c.l.b16 %v124
    %v137 = vunpack.c.l.b16 %v125
    %v138 = vunpack.c.l.b16 %v126
    %v139 = vpack.c.b16 %v136, %v135
    %v140 = vpack.c.b16 %v138, %v137
    %vm143 = vcmask 261120
    %v145 = vsel %vm143, 0, 0
    %147 = vmatpush.bf16.msra.mxu0 0
    %148 = vmatpush.bf16.msra.mxu0 0
    %149 = vmatpush.bf16.msra.mxu0 0
    %150 = vmatpush.bf16.msra.mxu0 0
    %151 = vmatpush.bf16.msra.mxu0 0
    %152 = vmatpush.bf16.msra.mxu0 0
    %153 = vmatpush.bf16.msra.mxu0 %v140
    %154 = vmatpush.bf16.msra.mxu0 %v139
    %155 = vmatmul.bf16.gmra.mxu0 %v145
    %v156 = vpop.f32.mrf.mxu0
    %v157 = vadd.f32 0.0, %v156
    %v158 = vpop.f32.mrf.mxu0
    %159 = vdwg.mxu0
    %v160 = vadd.f32 %v118, %v157
    %v161 = vtanh.pop %v160
    %v162 = vadd.f32 %v161, 1.0
    %v163 = vmul.f32 %v162, 0.0
    %165 = vrot.lane.b32.xlu0 %v161, 64
    %v166 = vpop.permute.xlu0 %165
    %v168 = vmul.f32 %v162, %v166
    %170 = vrot.lane.b32.xlu0 %v168, 32
    %v171 = vpop.permute.xlu0 %170
    %v173 = vadd.f32 %v163, %v171
    %v174 = vmul.f32 %v173, 0.5
    %v175 = vmul.f32 %v162, 0.5
    %v176 = vtanh.pop %v174
    %178 = vrot.lane.b32.xlu0 %v176, 64
    %v179 = vpop.permute.xlu0 %178
    %v181 = vmul.f32 %v175, %v179
    %183 = vrot.lane.b32.xlu0 %v181, 32
    %v184 = vpop.permute.xlu0 %183
    %v185 = vsel %vm143, %v184, 0
    %187 = vmatpush.msra.mxu0 0.0
    %188 = vmatpush.msra.mxu0 0.0
    %189 = vmatpush.msra.mxu0 0.0
    %190 = vmatpush.msra.mxu0 0.0
    %191 = vmatpush.msra.mxu0 0.0
    %192 = vmatpush.msra.mxu0 0.0
    %193 = vmatpush.msra.mxu0 0.0
    %194 = vmatpush.msra.mxu0 0.0
    %195 = vmatpush.msra.mxu0 0.0
    %196 = vmatpush.msra.mxu0 0.0
    %197 = vmatpush.msra.mxu0 0.0
    %198 = vmatpush.msra.mxu0 0.0
    %199 = vmatpush.msra.mxu0 %v130
    %200 = vmatpush.msra.mxu0 %v129
    %201 = vmatpush.msra.mxu0 %v128
    %202 = vmatpush.msra.mxu0 %v127
    %203 = vmatmul.f32.gmra.mxu0 %v185
    %v204 = vpop.f32.mrf.mxu0
    %v205 = vadd.f32 0.0, %v204
    %206 = vdwg.mxu0
    %207 = vst [vmem:[#allocation10] sm:$0x3] %v205
    %v208 = vpack.c.bf16 %v181, %v181
    %210 = vrot.lane.b32.xlu0 %v208, 32
    %v211 = vpop.permute.xlu0 %210
    %v213 = vsel %vm143, %v211, 0
    %215 = vmatpush.bf16.msra.mxu0 0
    %216 = vmatpush.bf16.msra.mxu0 0
    %217 = vmatpush.bf16.msra.mxu0 0
    %218 = vmatpush.bf16.msra.mxu0 0
    %219 = vmatpush.bf16.msra.mxu0 0
    %220 = vmatpush.bf16.msra.mxu0 0
    %221 = vmatpush.bf16.msra.mxu0 %v140
    %222 = vmatpush.bf16.msra.mxu0 %v139
    %223 = vmatmul.bf16.gmra.mxu0 %v213
    %v224 = vpop.f32.mrf.mxu0
    %v225 = vadd.f32 0.0, %v224
    %v226 = vpop.f32.mrf.mxu0
    %227 = vdwg.mxu0
    %v229 = vrot.slane %v225, 6
    %v231 = vadd.f32 %v118, %v229
    %v232 = vtanh.pop %v231
    %v233 = vadd.f32 %v232, 1.0
    %v235 = vrot.slane %v174, 6
    %v237 = vmul.f32 %v233, %v235
    %239 = vrot.lane.b32.xlu0 %v232, 64
    %v240 = vpop.permute.xlu0 %239
    %v242 = vmul.f32 %v233, %v240
    %244 = vrot.lane.b32.xlu0 %v242, 32
    %v245 = vpop.permute.xlu0 %244
    %v247 = vadd.f32 %v237, %v245
    %v248 = vmul.f32 %v247, 0.5
    %v249 = vmul.f32 %v233, 0.5
    %v250 = vtanh.pop %v248
    %252 = vrot.lane.b32.xlu0 %v250, 64
    %v253 = vpop.permute.xlu0 %252
    %v255 = vmul.f32 %v249, %v253
    %v257 = vrot.slane %v255, 2
    %258 = vrot.lane.b32.xlu0 %v257, 32
    %v259 = vpop.permute.xlu0 %258
    %v260 = vsel %vm143, %v259, 0
    %262 = vmatpush.msra.mxu0 0.0
    %263 = vmatpush.msra.mxu0 0.0
    %264 = vmatpush.msra.mxu0 0.0
    %265 = vmatpush.msra.mxu0 0.0
    %266 = vmatpush.msra.mxu0 0.0
    %267 = vmatpush.msra.mxu0 0.0
    %268 = vmatpush.msra.mxu0 0.0
    %269 = vmatpush.msra.mxu0 0.0
    %270 = vmatpush.msra.mxu0 0.0
    %271 = vmatpush.msra.mxu0 0.0
    %272 = vmatpush.msra.mxu0 0.0
    %273 = vmatpush.msra.mxu0 0.0
    %274 = vmatpush.msra.mxu0 %v130
    %275 = vmatpush.msra.mxu0 %v129
    %276 = vmatpush.msra.mxu0 %v128
    %277 = vmatpush.msra.mxu0 %v127
    %278 = vmatmul.f32.gmra.mxu0 %v260
    %v279 = vpop.f32.mrf.mxu0
    %v280 = vadd.f32 0.0, %v279
    %281 = vdwg.mxu0
    %282 = vst [vmem:[#allocation10 + $0x2] sm:$0x3] %v280
    %v283 = vpack.c.bf16 %v255, %v255
    %v285 = vrot.slane %v283, 1
    %286 = vrot.lane.b32.xlu0 %v285, 32
    %v287 = vpop.permute.xlu0 %286
    %v289 = vsel %vm143, %v287, 0
    %291 = vmatpush.bf16.msra.mxu0 0
    %292 = vmatpush.bf16.msra.mxu0 0
    %293 = vmatpush.bf16.msra.mxu0 0
    %294 = vmatpush.bf16.msra.mxu0 0
    %295 = vmatpush.bf16.msra.mxu0 0
    %296 = vmatpush.bf16.msra.mxu0 0
    %297 = vmatpush.bf16.msra.mxu0 %v140
    %298 = vmatpush.bf16.msra.mxu0 %v139
    %299 = vmatmul.bf16.gmra.mxu0 %v289
    %v300 = vpop.f32.mrf.mxu0
    %v301 = vadd.f32 0.0, %v300
    %v302 = vpop.f32.mrf.mxu0
    %303 = vdwg.mxu0
    %v305 = vrot.slane %v301, 4
    %v307 = vadd.f32 %v118, %v305
    %v308 = vtanh.pop %v307
    %v309 = vadd.f32 %v308, 1.0
    %v311 = vrot.slane %v248, 6
    %v313 = vmul.f32 %v309, %v311
    %315 = vrot.lane.b32.xlu0 %v308, 64
    %v316 = vpop.permute.xlu0 %315
    %v318 = vmul.f32 %v309, %v316
    %320 = vrot.lane.b32.xlu0 %v318, 32
    %v321 = vpop.permute.xlu0 %320
    %v323 = vadd.f32 %v313, %v321
    %v324 = vmul.f32 %v323, 0.5
    %v325 = vmul.f32 %v309, 0.5
    %v326 = vtanh.pop %v324
    %328 = vrot.lane.b32.xlu0 %v326, 64
    %v329 = vpop.permute.xlu0 %328
    %v331 = vmul.f32 %v325, %v329
    %v333 = vrot.slane %v331, 4
    %334 = vrot.lane.b32.xlu0 %v333, 32
    %v335 = vpop.permute.xlu0 %334
    %v336 = vsel %vm143, %v335, 0
    %338 = vmatpush.msra.mxu0 0.0
    %339 = vmatpush.msra.mxu0 0.0
    %340 = vmatpush.msra.mxu0 0.0
    %341 = vmatpush.msra.mxu0 0.0
    %342 = vmatpush.msra.mxu0 0.0
    %343 = vmatpush.msra.mxu0 0.0
    %344 = vmatpush.msra.mxu0 0.0
    %345 = vmatpush.msra.mxu0 0.0
    %346 = vmatpush.msra.mxu0 0.0
    %347 = vmatpush.msra.mxu0 0.0
    %348 = vmatpush.msra.mxu0 0.0
    %349 = vmatpush.msra.mxu0 0.0
    %350 = vmatpush.msra.mxu0 %v130
    %351 = vmatpush.msra.mxu0 %v129
    %352 = vmatpush.msra.mxu0 %v128
    %353 = vmatpush.msra.mxu0 %v127
    %354 = vmatmul.f32.gmra.mxu0 %v336
    %v355 = vpop.f32.mrf.mxu0
    %v356 = vadd.f32 0.0, %v355
    %357 = vdwg.mxu0
    %358 = vst [vmem:[#allocation10 + $0x4] sm:$0x3] %v356
    %v359 = vpack.c.bf16 %v331, %v331
    %v361 = vrot.slane %v359, 2
    %362 = vrot.lane.b32.xlu0 %v361, 32
    %v363 = vpop.permute.xlu0 %362
    %v365 = vsel %vm143, %v363, 0
    %367 = vmatpush.bf16.msra.mxu0 0
    %368 = vmatpush.bf16.msra.mxu0 0
    %369 = vmatpush.bf16.msra.mxu0 0
    %370 = vmatpush.bf16.msra.mxu0 0
    %371 = vmatpush.bf16.msra.mxu0 0
    %372 = vmatpush.bf16.msra.mxu0 0
    %373 = vmatpush.bf16.msra.mxu0 %v140
    %374 = vmatpush.bf16.msra.mxu0 %v139
    %375 = vmatmul.bf16.gmra.mxu0 %v365
    %v376 = vpop.f32.mrf.mxu0
    %v377 = vadd.f32 0.0, %v376
    %v378 = vpop.f32.mrf.mxu0
    %379 = vdwg.mxu0
    %v381 = vrot.slane %v377, 2
    %v383 = vadd.f32 %v118, %v381
    %v384 = vtanh.pop %v383
    %v385 = vadd.f32 %v384, 1.0
    %v387 = vrot.slane %v324, 6
    %v389 = vmul.f32 %v385, %v387
    %391 = vrot.lane.b32.xlu0 %v384, 64
    %v392 = vpop.permute.xlu0 %391
    %v394 = vmul.f32 %v385, %v392
    %396 = vrot.lane.b32.xlu0 %v394, 32
    %v397 = vpop.permute.xlu0 %396
    %v399 = vadd.f32 %v389, %v397
    %v400 = vmul.f32 %v399, 0.5
    %v401 = vmul.f32 %v385, 0.5
    %v402 = vtanh.pop %v400
    %404 = vrot.lane.b32.xlu0 %v402, 64
    %v405 = vpop.permute.xlu0 %404
    %v407 = vmul.f32 %v401, %v405
    %v409 = vrot.slane %v407, 6
    %410 = vrot.lane.b32.xlu0 %v409, 32
    %v411 = vpop.permute.xlu0 %410
    %v412 = vsel %vm143, %v411, 0
    %414 = vmatpush.msra.mxu0 0.0
    %415 = vmatpush.msra.mxu0 0.0
    %416 = vmatpush.msra.mxu0 0.0
    %417 = vmatpush.msra.mxu0 0.0
    %418 = vmatpush.msra.mxu0 0.0
    %419 = vmatpush.msra.mxu0 0.0
    %420 = vmatpush.msra.mxu0 0.0
    %421 = vmatpush.msra.mxu0 0.0
    %422 = vmatpush.msra.mxu0 0.0
    %423 = vmatpush.msra.mxu0 0.0
    %424 = vmatpush.msra.mxu0 0.0
    %425 = vmatpush.msra.mxu0 0.0
    %426 = vmatpush.msra.mxu0 %v130
    %427 = vmatpush.msra.mxu0 %v129
    %428 = vmatpush.msra.mxu0 %v128
    %429 = vmatpush.msra.mxu0 %v127
    %430 = vmatmul.f32.gmra.mxu0 %v412
    %v431 = vpop.f32.mrf.mxu0
    %v432 = vadd.f32 0.0, %v431
    %433 = vdwg.mxu0
    %434 = vst [vmem:[#allocation10 + $0x6] sm:$0x3] %v432
    %v435 = vpack.c.bf16 %v407, %v407
    %v437 = vrot.slane %v435, 3
    %438 = vrot.lane.b32.xlu0 %v437, 32
    %v439 = vpop.permute.xlu0 %438
    %v441 = vsel %vm143, %v439, 0
    %443 = vmatpush.bf16.msra.mxu0 0
    %444 = vmatpush.bf16.msra.mxu0 0
    %445 = vmatpush.bf16.msra.mxu0 0
    %446 = vmatpush.bf16.msra.mxu0 0
    %447 = vmatpush.bf16.msra.mxu0 0
    %448 = vmatpush.bf16.msra.mxu0 0
    %449 = vmatpush.bf16.msra.mxu0 %v140
    %450 = vmatpush.bf16.msra.mxu0 %v139
    %451 = vmatmul.bf16.gmra.mxu0 %v441
    %v452 = vpop.f32.mrf.mxu0
    %v453 = vadd.f32 0.0, %v452
    %v454 = vpop.f32.mrf.mxu0
    %455 = vdwg.mxu0
    %v456 = vadd.f32 %v121, %v453
    %v457 = vtanh.pop %v456
    %v458 = vadd.f32 %v457, 1.0
    %v460 = vrot.slane %v400, 6
    %v462 = vmul.f32 %v458, %v460
    %464 = vrot.lane.b32.xlu0 %v457, 64
    %v465 = vpop.permute.xlu0 %464
    %v467 = vmul.f32 %v458, %v465
    %469 = vrot.lane.b32.xlu0 %v467, 32
    %v470 = vpop.permute.xlu0 %469
    %v472 = vadd.f32 %v462, %v470
    %v473 = vmul.f32 %v472, 0.5
    %v474 = vmul.f32 %v458, 0.5
    %v475 = vtanh.pop %v473
    %477 = vrot.lane.b32.xlu0 %v475, 64
    %v478 = vpop.permute.xlu0 %477
    %v480 = vmul.f32 %v474, %v478
    %482 = vrot.lane.b32.xlu0 %v480, 32
    %v483 = vpop.permute.xlu0 %482
    %v484 = vsel %vm143, %v483, 0
    %486 = vmatpush.msra.mxu0 0.0
    %487 = vmatpush.msra.mxu0 0.0
    %488 = vmatpush.msra.mxu0 0.0
    %489 = vmatpush.msra.mxu0 0.0
    %490 = vmatpush.msra.mxu0 0.0
    %491 = vmatpush.msra.mxu0 0.0
    %492 = vmatpush.msra.mxu0 0.0
    %493 = vmatpush.msra.mxu0 0.0
    %494 = vmatpush.msra.mxu0 0.0
    %495 = vmatpush.msra.mxu0 0.0
    %496 = vmatpush.msra.mxu0 0.0
    %497 = vmatpush.msra.mxu0 0.0
    %498 = vmatpush.msra.mxu0 %v130
    %499 = vmatpush.msra.mxu0 %v129
    %500 = vmatpush.msra.mxu0 %v128
    %501 = vmatpush.msra.mxu0 %v127
    %502 = vmatmul.f32.gmra.mxu0 %v484
    %v503 = vpop.f32.mrf.mxu0
    %v504 = vadd.f32 0.0, %v503
    %505 = vdwg.mxu0
    %506 = vst [vmem:[#allocation10 + $0x8] sm:$0x3] %v504
    %v507 = vpack.c.bf16 %v480, %v480
    %509 = vrot.lane.b32.xlu0 %v507, 32
    %v510 = vpop.permute.xlu0 %509
    %v512 = vsel %vm143, %v510, 0
    %514 = vmatpush.bf16.msra.mxu0 0
    %515 = vmatpush.bf16.msra.mxu0 0
    %516 = vmatpush.bf16.msra.mxu0 0
    %517 = vmatpush.bf16.msra.mxu0 0
    %518 = vmatpush.bf16.msra.mxu0 0
    %519 = vmatpush.bf16.msra.mxu0 0
    %520 = vmatpush.bf16.msra.mxu0 %v140
    %521 = vmatpush.bf16.msra.mxu0 %v139
    %522 = vmatmul.bf16.gmra.mxu0 %v512
    %v523 = vpop.f32.mrf.mxu0
    %v524 = vadd.f32 0.0, %v523
    %v525 = vpop.f32.mrf.mxu0
    %526 = vdwg.mxu0
    %v528 = vrot.slane %v524, 6
    %v530 = vadd.f32 %v121, %v528
    %v531 = vtanh.pop %v530
    %v532 = vadd.f32 %v531, 1.0
    %v534 = vrot.slane %v473, 6
    %v536 = vmul.f32 %v532, %v534
    %538 = vrot.lane.b32.xlu0 %v531, 64
    %v539 = vpop.permute.xlu0 %538
    %v541 = vmul.f32 %v532, %v539
    %543 = vrot.lane.b32.xlu0 %v541, 32
    %v544 = vpop.permute.xlu0 %543
    %v546 = vadd.f32 %v536, %v544
    %v547 = vmul.f32 %v546, 0.5
    %v548 = vmul.f32 %v532, 0.5
    %v549 = vtanh.pop %v547
    %551 = vrot.lane.b32.xlu0 %v549, 64
    %v552 = vpop.permute.xlu0 %551
    %v554 = vmul.f32 %v548, %v552
    %v556 = vrot.slane %v554, 2
    %557 = vrot.lane.b32.xlu0 %v556, 32
    %v558 = vpop.permute.xlu0 %557
    %v559 = vsel %vm143, %v558, 0
    %561 = vmatpush.msra.mxu0 0.0
    %562 = vmatpush.msra.mxu0 0.0
    %563 = vmatpush.msra.mxu0 0.0
    %564 = vmatpush.msra.mxu0 0.0
    %565 = vmatpush.msra.mxu0 0.0
    %566 = vmatpush.msra.mxu0 0.0
    %567 = vmatpush.msra.mxu0 0.0
    %568 = vmatpush.msra.mxu0 0.0
    %569 = vmatpush.msra.mxu0 0.0
    %570 = vmatpush.msra.mxu0 0.0
    %571 = vmatpush.msra.mxu0 0.0
    %572 = vmatpush.msra.mxu0 0.0
    %573 = vmatpush.msra.mxu0 %v130
    %574 = vmatpush.msra.mxu0 %v129
    %575 = vmatpush.msra.mxu0 %v128
    %576 = vmatpush.msra.mxu0 %v127
    %577 = vmatmul.f32.gmra.mxu0 %v559
    %v578 = vpop.f32.mrf.mxu0
    %v579 = vadd.f32 0.0, %v578
    %580 = vdwg.mxu0
    %581 = vst [vmem:[#allocation10 + $0xa] sm:$0x3] %v579
    %v582 = vpack.c.bf16 %v554, %v554
    %v584 = vrot.slane %v582, 1
    %585 = vrot.lane.b32.xlu0 %v584, 32
    %v586 = vpop.permute.xlu0 %585
    %v588 = vsel %vm143, %v586, 0
    %590 = vmatpush.bf16.msra.mxu0 0
    %591 = vmatpush.bf16.msra.mxu0 0
    %592 = vmatpush.bf16.msra.mxu0 0
    %593 = vmatpush.bf16.msra.mxu0 0
    %594 = vmatpush.bf16.msra.mxu0 0
    %595 = vmatpush.bf16.msra.mxu0 0
    %596 = vmatpush.bf16.msra.mxu0 %v140
    %597 = vmatpush.bf16.msra.mxu0 %v139
    %598 = vmatmul.bf16.gmra.mxu0 %v588
    %v599 = vpop.f32.mrf.mxu0
    %v600 = vadd.f32 0.0, %v599
    %v601 = vpop.f32.mrf.mxu0
    %602 = vdwg.mxu0
    %v604 = vrot.slane %v600, 4
    %v606 = vadd.f32 %v121, %v604
    %v607 = vtanh.pop %v606
    %v608 = vadd.f32 %v607, 1.0
    %v610 = vrot.slane %v547, 6
    %v612 = vmul.f32 %v608, %v610
    %614 = vrot.lane.b32.xlu0 %v607, 64
    %v615 = vpop.permute.xlu0 %614
    %v617 = vmul.f32 %v608, %v615
    %619 = vrot.lane.b32.xlu0 %v617, 32
    %v620 = vpop.permute.xlu0 %619
    %v622 = vadd.f32 %v612, %v620
    %v623 = vmul.f32 %v622, 0.5
    %v624 = vmul.f32 %v608, 0.5
    %v625 = vtanh.pop %v623
    %627 = vrot.lane.b32.xlu0 %v625, 64
    %v628 = vpop.permute.xlu0 %627
    %v630 = vmul.f32 %v624, %v628
    %v632 = vrot.slane %v630, 4
    %633 = vrot.lane.b32.xlu0 %v632, 32
    %v634 = vpop.permute.xlu0 %633
    %v635 = vsel %vm143, %v634, 0
    %637 = vmatpush.msra.mxu0 0.0
    %638 = vmatpush.msra.mxu0 0.0
    %639 = vmatpush.msra.mxu0 0.0
    %640 = vmatpush.msra.mxu0 0.0
    %641 = vmatpush.msra.mxu0 0.0
    %642 = vmatpush.msra.mxu0 0.0
    %643 = vmatpush.msra.mxu0 0.0
    %644 = vmatpush.msra.mxu0 0.0
    %645 = vmatpush.msra.mxu0 0.0
    %646 = vmatpush.msra.mxu0 0.0
    %647 = vmatpush.msra.mxu0 0.0
    %648 = vmatpush.msra.mxu0 0.0
    %649 = vmatpush.msra.mxu0 %v130
    %650 = vmatpush.msra.mxu0 %v129
    %651 = vmatpush.msra.mxu0 %v128
    %652 = vmatpush.msra.mxu0 %v127
    %653 = vmatmul.f32.gmra.mxu0 %v635
    %v654 = vpop.f32.mrf.mxu0
    %v655 = vadd.f32 0.0, %v654
    %656 = vdwg.mxu0
    %657 = vst [vmem:[#allocation10 + $0xc] sm:$0x3] %v655
    %v658 = vpack.c.bf16 %v630, %v630
    %v660 = vrot.slane %v658, 2
    %661 = vrot.lane.b32.xlu0 %v660, 32
    %v662 = vpop.permute.xlu0 %661
    %v664 = vsel %vm143, %v662, 0
    %666 = vmatpush.bf16.msra.mxu0 0
    %667 = vmatpush.bf16.msra.mxu0 0
    %668 = vmatpush.bf16.msra.mxu0 0
    %669 = vmatpush.bf16.msra.mxu0 0
    %670 = vmatpush.bf16.msra.mxu0 0
    %671 = vmatpush.bf16.msra.mxu0 0
    %672 = vmatpush.bf16.msra.mxu0 %v140
    %673 = vmatpush.bf16.msra.mxu0 %v139
    %674 = vmatmul.bf16.gmra.mxu0 %v664
    %v675 = vpop.f32.mrf.mxu0
    %v676 = vadd.f32 0.0, %v675
    %v677 = vpop.f32.mrf.mxu0
    %678 = vdwg.mxu0
    %v680 = vrot.slane %v676, 2
    %v682 = vadd.f32 %v121, %v680
    %v683 = vtanh.pop %v682
    %v684 = vadd.f32 %v683, 1.0
    %v686 = vrot.slane %v623, 6
    %v688 = vmul.f32 %v684, %v686
    %690 = vrot.lane.b32.xlu0 %v683, 64
    %v691 = vpop.permute.xlu0 %690
    %v693 = vmul.f32 %v684, %v691
    %695 = vrot.lane.b32.xlu0 %v693, 32
    %v696 = vpop.permute.xlu0 %695
    %v698 = vadd.f32 %v688, %v696
    %v699 = vmul.f32 %v698, 0.5
    %v700 = vmul.f32 %v684, 0.5
    %v701 = vtanh.pop %v699
    %703 = vrot.lane.b32.xlu0 %v701, 64
    %v704 = vpop.permute.xlu0 %703
    %v706 = vmul.f32 %v700, %v704
    %v708 = vrot.slane %v706, 6
    %709 = vrot.lane.b32.xlu0 %v708, 32
    %v710 = vpop.permute.xlu0 %709
    %v711 = vsel %vm143, %v710, 0
    %713 = vmatpush.msra.mxu0 0.0
    %714 = vmatpush.msra.mxu0 0.0
    %715 = vmatpush.msra.mxu0 0.0
    %716 = vmatpush.msra.mxu0 0.0
    %717 = vmatpush.msra.mxu0 0.0
    %718 = vmatpush.msra.mxu0 0.0
    %719 = vmatpush.msra.mxu0 0.0
    %720 = vmatpush.msra.mxu0 0.0
    %721 = vmatpush.msra.mxu0 0.0
    %722 = vmatpush.msra.mxu0 0.0
    %723 = vmatpush.msra.mxu0 0.0
    %724 = vmatpush.msra.mxu0 0.0
    %725 = vmatpush.msra.mxu0 %v130
    %726 = vmatpush.msra.mxu0 %v129
    %727 = vmatpush.msra.mxu0 %v128
    %728 = vmatpush.msra.mxu0 %v127
    %729 = vmatmul.f32.gmra.mxu0 %v711
    %v730 = vpop.f32.mrf.mxu0
    %v731 = vadd.f32 0.0, %v730
    %732 = vdwg.mxu0
    %733 = vst [vmem:[#allocation10 + $0xe] sm:$0x3] %v731
    // Predicated region
    $region38: #{lstm_net_forward.1} parent=1 // pred_check
      _
    $region39: #{lstm_net_forward.1} parent=1 // pred_check_branch
      %735 = sbr.rel (0) target = $region41
    $region40: #{lstm_net_forward.1} parent=1 // pred_region
      %737 = vsyncadd [#allocation4], 0
      %s738 = sshll.u32 [#allocation10], 4
      %s739 = int_to_ptr.vmem [resolvable:$true] %s738
      %s740 = sshll.u32 %s5, 4
      %s741 = int_to_ptr.hbm [resolvable:$true] %s740
      %746 = dma.vmem_to_hbm [thread:$0]  %s739, 256, %s741, [#allocation4], 128, 128, 8
    $region41: #{lstm_net_forward.1} parent=1 // pred_fallthru
      _
    // Predicated region
    $region42: #{lstm_net_forward.1} parent=1 // pred_check
      _
    $region43: #{lstm_net_forward.1} parent=1 // pred_check_branch
      %748 = sbr.rel (0) target = $region45
    $region44: #{lstm_net_forward.1} parent=1 // pred_region
      %750 = dma.done [#allocation4], 256
    $region45: #{lstm_net_forward.1} parent=1 // pred_fallthru
      _
    %751 = vsyncpa [#allocation3], 1
    %752 = vsyncpa [#allocation6], 1
    %753 = vsyncpa [#allocation9], 1
    %754 = vsyncpa [#allocation4], 1

</llo_original>
